<compile_context>
chip_gen: v5e
topology: v5e:2x2
jax: 0.10.0
libtpu: 0.0.40
codegen_flags: <defaults>
</compile_context>

<pallas_src>
import functools

import jax
import jax.numpy as jnp
from jax.experimental import pallas as pl
from jax.experimental.pallas import tpu as pltpu


# ----------------------------- kernels ------------------------------------- #

def _sum_frames(grid_ref, f_blk):
    """Sum f_blk frames of the (1, f_blk, t_tok, C) block in f32 (unrolled adds)."""
    s = grid_ref[0, 0].astype(jnp.float32)
    for f in range(1, f_blk):
        s = s + grid_ref[0, f].astype(jnp.float32)
    return s


def _ln_epilogue(g, gamma, beta, eps):
    mu = jnp.mean(g, axis=-1, keepdims=True)
    xc = g - mu
    var = jnp.mean(xc * xc, axis=-1, keepdims=True)
    inv = jax.lax.rsqrt(var + eps)
    return xc * inv * gamma + beta


def _visual_embed_kernel_full(grid_ref, pos_ref, gamma_ref, beta_ref, out_ref,
                              *, n_frm, inv_n_frm, eps):
    """All frames folded into one block: no reduction grid axis, no scratch."""
    g = _sum_frames(grid_ref, n_frm) * inv_n_frm + pos_ref[...]
    out_ref[0] = _ln_epilogue(g, gamma_ref[...], beta_ref[...], eps).astype(out_ref.dtype)


def _visual_embed_kernel_partial(grid_ref, pos_ref, gamma_ref, beta_ref, out_ref,
                                 acc_ref, *, f_blk, inv_n_frm, eps):
    """Frames streamed F_BLK at a time along the (innermost, arbitrary) grid axis."""
    k = pl.program_id(2)

    @pl.when(k == 0)
    def _():
        acc_ref[...] = jnp.zeros_like(acc_ref)

    acc_ref[...] += _sum_frames(grid_ref, f_blk)

    @pl.when(k == pl.num_programs(2) - 1)
    def _():
        g = acc_ref[...] * inv_n_frm + pos_ref[...]
        out_ref[0] = _ln_epilogue(g, gamma_ref[...], beta_ref[...], eps).astype(out_ref.dtype)


# ----------------------------- wrapper ------------------------------------- #

def _round_up(x, m):
    return (x + m - 1) // m * m


def _vmem_capacity_bytes(default=64 * 1024 * 1024):
    """Generation-aware VMEM capacity (v7x: 64 MiB, v5e/v6e: 128 MiB)."""
    try:
        info = pltpu.get_tpu_info()
        cap = getattr(info, "vmem_capacity_bytes", None)
        if cap:
            return int(cap)
    except Exception:
        pass
    return default


def _pick_token_tile(n_tok, max_tile):
    """Token tile: multiple of 8, <= max_tile; exact divisor if one exists,
    otherwise the tail is handled by padding in the wrapper."""
    max_tile = max(8, (max_tile // 8) * 8)
    if n_tok <= max_tile:
        return _round_up(n_tok, 8)            # single (possibly padded) tile
    for t in range(max_tile, 7, -8):          # multiples of 8, largest first
        if n_tok % t == 0:
            return t
    return max_tile                           # no clean divisor -> pad to tile


def visual_input_embedding(grid, row_emb_table, col_emb_table, tok_emb,
                           ln_gamma, ln_beta, *, eps=1e-12, max_token_tile=512):
    """grid: (B, n_frm, H, W, C)  ->  embeddings: (B, H*W, C)"""
    B, n_frm, H, W, C = grid.shape
    n_tok = H * W
    in_is = jnp.dtype(grid.dtype).itemsize
    out_is = in_is

    # ---- wrapper-side glue (tiny, computed once) -------------------------- #
    # Embedding "lookup" with arange ids is a slice of the table; fold the
    # row / col / token-type adds into a single (n_tok, C) f32 bias slab.
    pos = (row_emb_table[:H].astype(jnp.float32)[:, None, :]
           + col_emb_table[:W].astype(jnp.float32)[None, :, :]
           + jnp.reshape(tok_emb, (C,)).astype(jnp.float32)[None, None, :]
           ).reshape(n_tok, C)
    gamma2d = ln_gamma.reshape(1, C).astype(jnp.float32)
    beta2d = ln_beta.reshape(1, C).astype(jnp.float32)

    # ---- generation-aware tiling ------------------------------------------ #
    cap = _vmem_capacity_bytes()
    budget = int(cap * 0.70)                  # leave headroom for compiler scratch

    # Per-token-row VMEM bytes with 1 frame/step (double-buffered frame, bias,
    # output + f32 accumulator) -> upper bound on the token tile.
    row_bytes = C * (2 * in_is + 2 * 4 + 2 * out_is + 4)
    max_tile_by_vmem = max(8, (budget // row_bytes) // 8 * 8)
    t_tok = _pick_token_tile(n_tok, min(max_token_tile, max_tile_by_vmem))

    # v7x has 2 TensorCores: make sure there are >=2 parallel grid points.
    if B == 1 and _round_up(n_tok, t_tok) // t_tok < 2 and t_tok >= 16:
        t_tok = _round_up((t_tok + 1) // 2, 8)

    n_tok_pad = _round_up(n_tok, t_tok)
    n_tiles = n_tok_pad // t_tok

    # Flatten spatial dims -> lane-dense (tokens, C) slabs; pad tail if needed.
    grid_flat = grid.reshape(B, n_frm, n_tok, C)
    if n_tok_pad != n_tok:
        grid_flat = jnp.pad(grid_flat, ((0, 0), (0, 0), (0, n_tok_pad - n_tok), (0, 0)))
        pos = jnp.pad(pos, ((0, n_tok_pad - n_tok), (0, 0)))

    # ---- frame folding (F_BLK frames per grid step) ----------------------- #
    fixed = 2 * t_tok * C * 4 + 2 * t_tok * C * out_is + 4 * C * 4   # bias + out + gamma/beta

    def _need(f_blk, with_acc):
        return (fixed + 2 * f_blk * t_tok * C * in_is
                + (t_tok * C * 4 if with_acc else 0))

    if _need(n_frm, False) <= budget:
        f_blk, full_fold = n_frm, True        # whole frame axis in one block
    else:
        full_fold = False
        f_blk = 1
        for d in range(n_frm - 1, 0, -1):     # largest divisor of n_frm that fits
            if n_frm % d == 0 and _need(d, True) <= budget:
                f_blk = d
                break

    need = _need(f_blk, not full_fold)
    vmem_limit = int(min(max(int(need * 1.25) + (1 << 20), 8 << 20), int(cap * 0.9)))

    out_shape = jax.ShapeDtypeStruct((B, n_tok_pad, C), grid.dtype)

    if full_fold:
        kernel = functools.partial(_visual_embed_kernel_full,
                                   n_frm=n_frm, inv_n_frm=1.0 / n_frm, eps=eps)
        out = pl.pallas_call(
            kernel,
            out_shape=out_shape,
            grid_spec=pltpu.PrefetchScalarGridSpec(
                num_scalar_prefetch=0,
                grid=(n_tiles, B),                 # bias index changes only on t
                in_specs=[
                    pl.BlockSpec((1, n_frm, t_tok, C), lambda t, b: (b, 0, t, 0)),
                    pl.BlockSpec((t_tok, C), lambda t, b: (t, 0)),     # bias slab
                    pl.BlockSpec((1, C), lambda t, b: (0, 0)),         # gamma
                    pl.BlockSpec((1, C), lambda t, b: (0, 0)),         # beta
                ],
                out_specs=pl.BlockSpec((1, t_tok, C), lambda t, b: (b, t, 0)),
            ),
            compiler_params=pltpu.CompilerParams(
                dimension_semantics=("parallel", "parallel"),
                vmem_limit_bytes=vmem_limit),
        )(grid_flat, pos, gamma2d, beta2d)
    else:
        kernel = functools.partial(_visual_embed_kernel_partial,
                                   f_blk=f_blk, inv_n_frm=1.0 / n_frm, eps=eps)
        out = pl.pallas_call(
            kernel,
            out_shape=out_shape,
            grid_spec=pltpu.PrefetchScalarGridSpec(
                num_scalar_prefetch=0,
                grid=(n_tiles, B, n_frm // f_blk),    # reduction axis innermost
                in_specs=[
                    pl.BlockSpec((1, f_blk, t_tok, C), lambda t, b, k: (b, k, t, 0)),
                    pl.BlockSpec((t_tok, C), lambda t, b, k: (t, 0)),  # bias slab
                    pl.BlockSpec((1, C), lambda t, b, k: (0, 0)),      # gamma
                    pl.BlockSpec((1, C), lambda t, b, k: (0, 0)),      # beta
                ],
                out_specs=pl.BlockSpec((1, t_tok, C), lambda t, b, k: (b, t, 0)),
                scratch_shapes=[pltpu.VMEM((t_tok, C), jnp.float32)],  # f32 acc
            ),
            compiler_params=pltpu.CompilerParams(
                dimension_semantics=("parallel", "parallel", "arbitrary"),
                vmem_limit_bytes=vmem_limit),
        )(grid_flat, pos, gamma2d, beta2d)

    if n_tok_pad != n_tok:
        out = out[:, :n_tok, :]

    # TODO(synk): dropout omitted (inference / identity); training-time random
    # pixel sampling (index_select on sampled token ids) is training-only, not implemented.
    return out


# ----------------------------- reference & test ----------------------------- #

def _reference(grid, row_emb_table, col_emb_table, tok_emb, ln_gamma, ln_beta,
               eps=1e-12):
    B, n_frm, H, W, C = grid.shape
    g = jnp.mean(grid.astype(jnp.float32), axis=1)
    g = g + row_emb_table[:H][None, :, None, :]
    g = g + col_emb_table[:W][None, None, :, :]
    g = g + tok_emb.reshape(1, 1, 1, C)
    mu = jnp.mean(g, axis=-1, keepdims=True)
    var = jnp.mean((g - mu) ** 2, axis=-1, keepdims=True)
    y = (g - mu) * jax.lax.rsqrt(var + eps) * ln_gamma + ln_beta
    return y.reshape(B, H * W, C)


if __name__ == "__main__":
    # Small config consistent with the module; C=128 keeps the hidden dim
    # lane-dense (one full vreg lane span) as in the real model (e.g. 768).
    B, n_frm, H, W, C = 2, 4, 8, 16, 128
    max_rows, max_cols = 16, 16

    key = jax.random.PRNGKey(0)
    k_grid, k_row, k_col, k_tok, k_gamma, k_beta = jax.random.split(key, 6)

    grid_in = jax.random.normal(k_grid, (B, n_frm, H, W, C), dtype=jnp.float32)
    row_table = 0.02 * jax.random.normal(k_row, (max_rows, C), dtype=jnp.float32)
    col_table = 0.02 * jax.random.normal(k_col, (max_cols, C), dtype=jnp.float32)
    tok_emb = 0.02 * jax.random.normal(k_tok, (1, C), dtype=jnp.float32)
    ln_gamma = jnp.ones((C,), jnp.float32) + 0.01 * jax.random.normal(k_gamma, (C,))
    ln_beta = 0.01 * jax.random.normal(k_beta, (C,), dtype=jnp.float32)

    out = visual_input_embedding(grid_in, row_table, col_table, tok_emb,
                                 ln_gamma, ln_beta)
    out = jax.block_until_ready(out)

    ref = _reference(grid_in, row_table, col_table, tok_emb, ln_gamma, ln_beta)
    assert out.shape == (B, H * W, C)
    assert jnp.allclose(out, ref, atol=1e-5, rtol=1e-5)
    print("KERNEL_OK")
</pallas_src>

<mosaic_0001>
module attributes {stable_mosaic.version = 11 : i64} {
  func.func @_visual_embed_kernel_full(%arg0: i32, %arg1: i32, %arg2: memref<1x4x128x128xf32, #tpu.memory_space<vmem>>, %arg3: memref<128x128xf32, #tpu.memory_space<vmem>>, %arg4: memref<1x128xf32, #tpu.memory_space<vmem>>, %arg5: memref<1x128xf32, #tpu.memory_space<vmem>>, %arg6: memref<1x128x128xf32, #tpu.memory_space<vmem>>) attributes {dimension_semantics = [#tpu.dimension_semantics<parallel>, #tpu.dimension_semantics<parallel>], iteration_bounds = array<i64: 1, 2>, scalar_prefetch = 0 : i64, scratch_operands = 0 : i64, tpu.core_type = #tpu.core_type<tc>, window_params = [{transform_indices = @transform_0, window_bounds = array<i64: 1, 4, 128, 128>}, {transform_indices = @transform_1, window_bounds = array<i64: 128, 128>}, {pipeline_mode = #tpu.pipeline_mode<synchronous>, transform_indices = @transform_2, window_bounds = array<i64: 1, 128>}, {pipeline_mode = #tpu.pipeline_mode<synchronous>, transform_indices = @transform_3, window_bounds = array<i64: 1, 128>}, {transform_indices = @transform_4, window_bounds = array<i64: 1, 128, 128>}]} {
    %c0 = arith.constant 0 : index
    %c0_0 = arith.constant 0 : index
    %c0_1 = arith.constant 0 : index
    %c0_2 = arith.constant 0 : index
    %0 = vector.load %arg2[%c0, %c0_0, %c0_1, %c0_2] : memref<1x4x128x128xf32, #tpu.memory_space<vmem>>, vector<1x1x128x128xf32>
    %1 = vector.shape_cast %0 : vector<1x1x128x128xf32> to vector<128x128xf32>
    %c0_3 = arith.constant 0 : index
    %c1 = arith.constant 1 : index
    %c0_4 = arith.constant 0 : index
    %c0_5 = arith.constant 0 : index
    %2 = vector.load %arg2[%c0_3, %c1, %c0_4, %c0_5] : memref<1x4x128x128xf32, #tpu.memory_space<vmem>>, vector<1x1x128x128xf32>
    %3 = vector.shape_cast %2 : vector<1x1x128x128xf32> to vector<128x128xf32>
    %4 = arith.addf %1, %3 : vector<128x128xf32>
    %c0_6 = arith.constant 0 : index
    %c2 = arith.constant 2 : index
    %c0_7 = arith.constant 0 : index
    %c0_8 = arith.constant 0 : index
    %5 = vector.load %arg2[%c0_6, %c2, %c0_7, %c0_8] : memref<1x4x128x128xf32, #tpu.memory_space<vmem>>, vector<1x1x128x128xf32>
    %6 = vector.shape_cast %5 : vector<1x1x128x128xf32> to vector<128x128xf32>
    %7 = arith.addf %4, %6 : vector<128x128xf32>
    %c0_9 = arith.constant 0 : index
    %c3 = arith.constant 3 : index
    %c0_10 = arith.constant 0 : index
    %c0_11 = arith.constant 0 : index
    %8 = vector.load %arg2[%c0_9, %c3, %c0_10, %c0_11] : memref<1x4x128x128xf32, #tpu.memory_space<vmem>>, vector<1x1x128x128xf32>
    %9 = vector.shape_cast %8 : vector<1x1x128x128xf32> to vector<128x128xf32>
    %10 = arith.addf %7, %9 : vector<128x128xf32>
    %cst = arith.constant 2.500000e-01 : f32
    %11 = vector.broadcast %cst : f32 to vector<128x128xf32>
    %12 = arith.mulf %10, %11 : vector<128x128xf32>
    %c0_12 = arith.constant 0 : index
    %c0_13 = arith.constant 0 : index
    %13 = vector.load %arg3[%c0_12, %c0_13] : memref<128x128xf32, #tpu.memory_space<vmem>>, vector<128x128xf32>
    %14 = arith.addf %12, %13 : vector<128x128xf32>
    %c0_14 = arith.constant 0 : index
    %c0_15 = arith.constant 0 : index
    %15 = vector.load %arg4[%c0_14, %c0_15] : memref<1x128xf32, #tpu.memory_space<vmem>>, vector<1x128xf32>
    %c0_16 = arith.constant 0 : index
    %c0_17 = arith.constant 0 : index
    %16 = vector.load %arg5[%c0_16, %c0_17] : memref<1x128xf32, #tpu.memory_space<vmem>>, vector<1x128xf32>
    %cst_18 = arith.constant dense<0.000000e+00> : vector<128xf32>
    %17 = vector.multi_reduction <add>, %14, %cst_18 [1] : vector<128x128xf32> to vector<128xf32>
    %18 = vector.shape_cast %17 : vector<128xf32> to vector<128x1xf32>
    %cst_19 = arith.constant 1.280000e+02 : f32
    %19 = vector.broadcast %cst_19 : f32 to vector<128x1xf32>
    %20 = arith.divf %18, %19 : vector<128x1xf32>
    %21 = vector.broadcast %20 : vector<128x1xf32> to vector<128x128xf32>
    %22 = arith.subf %14, %21 : vector<128x128xf32>
    %23 = arith.mulf %22, %22 : vector<128x128xf32>
    %cst_20 = arith.constant dense<0.000000e+00> : vector<128xf32>
    %24 = vector.multi_reduction <add>, %23, %cst_20 [1] : vector<128x128xf32> to vector<128xf32>
    %25 = vector.shape_cast %24 : vector<128xf32> to vector<128x1xf32>
    %cst_21 = arith.constant 1.280000e+02 : f32
    %26 = vector.broadcast %cst_21 : f32 to vector<128x1xf32>
    %27 = arith.divf %25, %26 : vector<128x1xf32>
    %cst_22 = arith.constant 9.99999996E-13 : f32
    %28 = vector.broadcast %cst_22 : f32 to vector<128x1xf32>
    %29 = arith.addf %27, %28 : vector<128x1xf32>
    %30 = math.rsqrt %29 : vector<128x1xf32>
    %31 = vector.broadcast %30 : vector<128x1xf32> to vector<128x128xf32>
    %32 = arith.mulf %22, %31 : vector<128x128xf32>
    %33 = vector.broadcast %15 : vector<1x128xf32> to vector<128x128xf32>
    %34 = arith.mulf %32, %33 : vector<128x128xf32>
    %35 = vector.broadcast %16 : vector<1x128xf32> to vector<128x128xf32>
    %36 = arith.addf %34, %35 : vector<128x128xf32>
    %c0_23 = arith.constant 0 : index
    %c0_24 = arith.constant 0 : index
    %c0_25 = arith.constant 0 : index
    %37 = vector.load %arg6[%c0_23, %c0_24, %c0_25] : memref<1x128x128xf32, #tpu.memory_space<vmem>>, vector<1x128x128xf32>
    %38 = vector.shape_cast %37 : vector<1x128x128xf32> to vector<128x128xf32>
    %39 = vector.shape_cast %36 : vector<128x128xf32> to vector<1x128x128xf32>
    tpu.vector_store %arg6[%c0_23, %c0_24, %c0_25], %39 {strides = array<i32>} : memref<1x128x128xf32, #tpu.memory_space<vmem>>, vector<1x128x128xf32>,
    return
  }
  func.func @transform_0(%arg0: i32, %arg1: i32) -> (i32, i32, i32, i32) {
    %c0_i32 = arith.constant 0 : i32
    %c0_i32_0 = arith.constant 0 : i32
    %c0_i32_1 = arith.constant 0 : i32
    return %arg1, %c0_i32, %arg0, %c0_i32_0 : i32, i32, i32, i32
  }
  func.func @transform_1(%arg0: i32, %arg1: i32) -> (i32, i32) {
    %c0_i32 = arith.constant 0 : i32
    %c0_i32_0 = arith.constant 0 : i32
    return %arg0, %c0_i32 : i32, i32
  }
  func.func @transform_2(%arg0: i32, %arg1: i32) -> (i32, i32) {
    %c0_i32 = arith.constant 0 : i32
    %c0_i32_0 = arith.constant 0 : i32
    %c0_i32_1 = arith.constant 0 : i32
    return %c0_i32, %c0_i32_0 : i32, i32
  }
  func.func @transform_3(%arg0: i32, %arg1: i32) -> (i32, i32) {
    %c0_i32 = arith.constant 0 : i32
    %c0_i32_0 = arith.constant 0 : i32
    %c0_i32_1 = arith.constant 0 : i32
    return %c0_i32, %c0_i32_0 : i32, i32
  }
  func.func @transform_4(%arg0: i32, %arg1: i32) -> (i32, i32, i32) {
    %c0_i32 = arith.constant 0 : i32
    %c0_i32_0 = arith.constant 0 : i32
    return %arg1, %arg0, %c0_i32 : i32, i32, i32
  }
}

</mosaic_0001>

<llo_original>
// kernel: tpu_custom_call.1
$region0: #{tpu_custom_call.1}
  #allocation0 [shape = 'u32[]', space=smem, size = 0x4, offset = 0x4, fixed_abs, tag = 'smem constant byte address 0x4 - core index']
  #allocation1 [shape = 'u32[72,128]{1,0:T(1,128)}', space=vmem, size = 0x9000, scoped, tag = 'internal scratch']
  %s0 = inlined_call_operand.hbm [shape: f32[2,4,128,128], index: 0, kind: input, shape index: {}]
  %s1 = inlined_call_operand.hbm [shape: f32[128,128], index: 1, kind: input, shape index: {}]
  %s2 = inlined_call_operand.vmem [shape: f32[1,128], index: 2, kind: input, shape index: {}]
  %s3 = inlined_call_operand.vmem [shape: f32[1,128], index: 3, kind: input, shape index: {}]
  %s4 = inlined_call_operand.hbm [shape: f32[2,128,128], index: 4, kind: output, shape index: {}]
  %s5 = sld [smem:[#allocation0]]
  $region57: #{tpu_custom_call.1} parent=0
    _
  %s7 = ssub.s32 1, %s5
  %s8 = scalar_select 0, %s7, %s5
  $region1: #{tpu_custom_call.1} parent=0
    #allocation2 [shape = 'u8[524288]{0}', space=vmem, size = 0x80000, scoped, tag = 'input window, operand 0']
    #allocation3 [shape = 's32[2]{0}', space=sflag, size = 0x8, scoped, tag = 'scoped memory for tpu_custom_call.1']
    #allocation4 [shape = 's32[2]{0}', space=sflag, size = 0x8, scoped, tag = 'scoped memory for tpu_custom_call.1']
    #allocation5 [shape = 'u8[65536]{0}', space=vmem, size = 0x10000, scoped, tag = 'input window, operand 1, single buffered']
    #allocation6 [shape = 's32[1]{0}', space=sflag, size = 0x4, scoped, tag = 'scoped memory for tpu_custom_call.1']
    #allocation7 [shape = 'u8[131072]{0}', space=vmem, size = 0x20000, scoped, tag = 'output window, operand 0']
    %9 = vsyncpa [#allocation3], 0
    %s10 = scalar_lea.sflag [#allocation3], 1
    %11 = vsyncpa %s10, 0
    %12 = vsyncpa [#allocation6], 0
    %13 = vsyncpa [#allocation4], 0
    %s14 = scalar_lea.sflag [#allocation4], 1
    %15 = vsyncpa %s14, 0
    loop: start=0, step=1, limit=4
    $region2: #{tpu_custom_call.1} parent=1 // loop_pre_header
      _
    $region3: #{tpu_custom_call.1} parent=1 // loop_header
      %s17 = sphi 0, %s21
      %p18 = scmp.ge.s32.totalorder %s17, 4
      %s24 = sphi 0, %s36
      %s25 = sphi 0, %s32
      %s26 = sphi 0, %s24
      %s27 = sphi 0, %s25
      %s28 = sphi 0, %s26
      %s29 = sphi 0, %s27
      %s41 = sphi 0, %s43
      %s44 = sphi 0, %s41
      %s45 = sphi 0, %s44
      %s61 = sphi 0, %s45
      %s67 = sphi 0, %s69
      %s70 = sphi 0, %s67
      %s71 = sphi 0, %s70
      %s87 = sphi 0, %s71
      %s91 = sphi 0, %s91
      %s93 = sphi 0, %s91
      %s94 = sphi 0, %s93
      %s108 = sphi 0, %s94
      %s112 = sphi 0, %s112
      %s114 = sphi 0, %s112
      %s115 = sphi 0, %s114
      %s129 = sphi 0, %s115
      %s137 = sphi 0, %s139
      %s140 = sphi 0, %s137
      %s141 = sphi 0, %s140
      %s157 = sphi 0, %s141
    $region4: #{tpu_custom_call.1} parent=1 // loop_header_branch
      %20 = sbr.rel (%p18) target = $region8
    $region5: #{tpu_custom_call.1} parent=1 // loop_body
      %s22 = ssub.s32 %s17, 1
      %s23 = ssub.s32 %s17, 2
      %s30 = sadd.s32 1, %s25
      %p31 = scmp.ge.s32.totalorder %s30, 2
      %s32 = scalar_select %p31, 0, %s30
      %s33 = sadd.s32 1, %s24
      %s34 = scalar_select %p31, %s33, %s24
      %p35 = scmp.ge.s32.totalorder %s34, 1
      %s36 = scalar_select %p35, 0, %s34
      %s37 = ssub.s32 %s25, %s32
      %s38 = ssub.s32 %s24, %s36
      %s39 = sor.u32 %s37, %s38
      %p40 = scmp.eq.s32.totalorder %s39, 0
      %s42 = sadd.s32 %s41, 1
      %s43 = scalar_select %p40, %s41, %s42
      %p46 = pneg %p40
      %p47 = scmp.eq.s32.totalorder %s17, 1
      %p48 = por %p46, %p47
      %p49 = scmp.ne.s32.totalorder %s41, %s44
      %p50 = scmp.eq.s32.totalorder %s17, 0
      %p51 = por %p49, %p50
      %p52 = scmp.ne.s32.totalorder %s41, %s44
      %p53 = scmp.eq.s32.totalorder %s22, 1
      %p54 = por %p52, %p53
      %p55 = scmp.ne.s32.totalorder %s44, %s45
      %p56 = scmp.eq.s32.totalorder %s22, 0
      %p57 = por %p55, %p56
      %p58 = scmp.ne.s32.totalorder %s44, %s45
      %p59 = scmp.eq.s32.totalorder %s23, 1
      %p60 = por %p58, %p59
      %p62 = scmp.ne.s32.totalorder %s45, %s61
      %p63 = scmp.eq.s32.totalorder %s23, 0
      %p64 = por %p62, %p63
      %s65 = ssub.s32 %s24, %s36
      %p66 = scmp.eq.s32.totalorder %s65, 0
      %s68 = sadd.s32 %s67, 1
      %s69 = scalar_select %p66, %s67, %s68
      %p72 = pneg %p66
      %p73 = scmp.eq.s32.totalorder %s17, 1
      %p74 = por %p72, %p73
      %p75 = scmp.ne.s32.totalorder %s67, %s70
      %p76 = scmp.eq.s32.totalorder %s17, 0
      %p77 = por %p75, %p76
      %p78 = scmp.ne.s32.totalorder %s67, %s70
      %p79 = scmp.eq.s32.totalorder %s22, 1
      %p80 = por %p78, %p79
      %p81 = scmp.ne.s32.totalorder %s70, %s71
      %p82 = scmp.eq.s32.totalorder %s22, 0
      %p83 = por %p81, %p82
      %p84 = scmp.ne.s32.totalorder %s70, %s71
      %p85 = scmp.eq.s32.totalorder %s23, 1
      %p86 = por %p84, %p85
      %p88 = scmp.ne.s32.totalorder %s71, %s87
      %p89 = scmp.eq.s32.totalorder %s23, 0
      %p90 = por %p88, %p89
      %s92 = sadd.s32 %s91, 1
      %p95 = scmp.eq.s32.totalorder %s17, 1
      %p96 = scmp.ne.s32.totalorder %s91, %s93
      %p97 = scmp.eq.s32.totalorder %s17, 0
      %p98 = por %p96, %p97
      %p99 = scmp.ne.s32.totalorder %s91, %s93
      %p100 = scmp.eq.s32.totalorder %s22, 1
      %p101 = por %p99, %p100
      %p102 = scmp.ne.s32.totalorder %s93, %s94
      %p103 = scmp.eq.s32.totalorder %s22, 0
      %p104 = por %p102, %p103
      %p105 = scmp.ne.s32.totalorder %s93, %s94
      %p106 = scmp.eq.s32.totalorder %s23, 1
      %p107 = por %p105, %p106
      %p109 = scmp.ne.s32.totalorder %s94, %s108
      %p110 = scmp.eq.s32.totalorder %s23, 0
      %p111 = por %p109, %p110
      %s113 = sadd.s32 %s112, 1
      %p116 = scmp.eq.s32.totalorder %s17, 1
      %p117 = scmp.ne.s32.totalorder %s112, %s114
      %p118 = scmp.eq.s32.totalorder %s17, 0
      %p119 = por %p117, %p118
      %p120 = scmp.ne.s32.totalorder %s112, %s114
      %p121 = scmp.eq.s32.totalorder %s22, 1
      %p122 = por %p120, %p121
      %p123 = scmp.ne.s32.totalorder %s114, %s115
      %p124 = scmp.eq.s32.totalorder %s22, 0
      %p125 = por %p123, %p124
      %p126 = scmp.ne.s32.totalorder %s114, %s115
      %p127 = scmp.eq.s32.totalorder %s23, 1
      %p128 = por %p126, %p127
      %p130 = scmp.ne.s32.totalorder %s115, %s129
      %p131 = scmp.eq.s32.totalorder %s23, 0
      %p132 = por %p130, %p131
      %s133 = ssub.s32 %s25, %s32
      %s134 = ssub.s32 %s24, %s36
      %s135 = sor.u32 %s133, %s134
      %p136 = scmp.eq.s32.totalorder %s135, 0
      %s138 = sadd.s32 %s137, 1
      %s139 = scalar_select %p136, %s137, %s138
      %p142 = pneg %p136
      %p143 = scmp.eq.s32.totalorder %s17, 1
      %p144 = por %p142, %p143
      %p145 = scmp.ne.s32.totalorder %s137, %s140
      %p146 = scmp.eq.s32.totalorder %s17, 0
      %p147 = por %p145, %p146
      %p148 = scmp.ne.s32.totalorder %s137, %s140
      %p149 = scmp.eq.s32.totalorder %s22, 1
      %p150 = por %p148, %p149
      %p151 = scmp.ne.s32.totalorder %s140, %s141
      %p152 = scmp.eq.s32.totalorder %s22, 0
      %p153 = por %p151, %p152
      %p154 = scmp.ne.s32.totalorder %s140, %s141
      %p155 = scmp.eq.s32.totalorder %s23, 1
      %p156 = por %p154, %p155
      %p158 = scmp.ne.s32.totalorder %s141, %s157
      %p159 = scmp.eq.s32.totalorder %s23, 0
      %p160 = por %p158, %p159
      %p161 = scmp.le.s32.totalorder 1, %s17
      %p162 = scmp.lt.s32.totalorder %s17, 3
      %p163 = pnand %p161, %p162
      %p164 = pneg %p163
      // Predicated region
      $region9: #{tpu_custom_call.1} parent=5 // pred_check
        _
      $region10: #{tpu_custom_call.1} parent=5 // pred_check_branch
        %166 = sbr.rel (%p163) target = $region12
      $region11: #{tpu_custom_call.1} parent=5 // pred_region
        %s167 = ssub.s32 %s17, 1
        // Predicated region
        $region13: #{tpu_custom_call.1} parent=11 // pred_check
          %p168 = pneg %p83
        $region14: #{tpu_custom_call.1} parent=11 // pred_check_branch
          %170 = sbr.rel (%p168) target = $region16
        $region15: #{tpu_custom_call.1} parent=11 // pred_region
          %s171 = smul.u32 16, %s26
          %173 = vsyncadd [#allocation6], 0
          %s174 = smul.addr %s171, 8
          %s175 = scalar_lea.hbm %s1, %s174
          %s176 = sshll.u32 %s175, 4
          %s177 = int_to_ptr.hbm [resolvable:$true] %s176
          %s178 = sshll.u32 [#allocation5], 4
          %s179 = int_to_ptr.vmem [resolvable:$true] %s178
          %184 = dma.hbm_to_vmem [thread:$0]  %s177, 2048, %s179, [#allocation6], 128, 128, 8
        $region16: #{tpu_custom_call.1} parent=11 // pred_fallthru
          _
        // Predicated region
        $region17: #{tpu_custom_call.1} parent=11 // pred_check
          %p185 = pneg %p104
        $region18: #{tpu_custom_call.1} parent=11 // pred_check_branch
          %187 = sbr.rel (%p185) target = $region20
        $region19: #{tpu_custom_call.1} parent=11 // pred_region
          _
        $region20: #{tpu_custom_call.1} parent=11 // pred_fallthru
          _
        // Predicated region
        $region21: #{tpu_custom_call.1} parent=11 // pred_check
          %p188 = pneg %p125
        $region22: #{tpu_custom_call.1} parent=11 // pred_check_branch
          %190 = sbr.rel (%p188) target = $region24
        $region23: #{tpu_custom_call.1} parent=11 // pred_region
          _
        $region24: #{tpu_custom_call.1} parent=11 // pred_fallthru
          _
      $region12: #{tpu_custom_call.1} parent=5 // pred_fallthru
        _
      %p191 = scmp.lt.s32.totalorder %s17, 2
      // Predicated region
      $region25: #{tpu_custom_call.1} parent=5 // pred_check
        %p192 = pneg %p191
      $region26: #{tpu_custom_call.1} parent=5 // pred_check_branch
        %194 = sbr.rel (%p192) target = $region28
      $region27: #{tpu_custom_call.1} parent=5 // pred_region
        // Predicated region
        $region29: #{tpu_custom_call.1} parent=27 // pred_check
          %p195 = pneg %p51
        $region30: #{tpu_custom_call.1} parent=27 // pred_check_branch
          %197 = sbr.rel (%p195) target = $region32
        $region31: #{tpu_custom_call.1} parent=27 // pred_region
          %s198 = sand.u32 %s41, 1
          %s199 = scalar_lea.sflag [#allocation3], %s198
          %s200 = sand.u32 %s41, 1
          %s201 = smul.addr %s200, 512
          %s202 = scalar_lea.vmem [#allocation2], %s201
          %s203 = smul.u32 16, %s24
          %205 = vsyncadd %s199, 0
          %s206 = smul.addr %s25, 64
          %s207 = sadd.s32 %s203, %s206
          %s208 = smul.addr %s207, 8
          %s209 = scalar_lea.hbm %s0, %s208
          %s210 = sshll.u32 %s209, 4
          %s211 = int_to_ptr.hbm [resolvable:$true] %s210
          %s212 = sshll.u32 %s202, 4
          %s213 = int_to_ptr.vmem [resolvable:$true] %s212
          %218 = dma.hbm_to_vmem [thread:$0]  %s211, 8192, %s213, %s199, 128, 128, 8
        $region32: #{tpu_custom_call.1} parent=27 // pred_fallthru
          _
      $region28: #{tpu_custom_call.1} parent=5 // pred_fallthru
        _
      %p219 = scmp.le.s32.totalorder 1, %s17
      %p220 = scmp.lt.s32.totalorder %s17, 3
      %p221 = pnand %p219, %p220
      %p222 = pneg %p221
      // Predicated region
      $region33: #{tpu_custom_call.1} parent=5 // pred_check
        _
      $region34: #{tpu_custom_call.1} parent=5 // pred_check_branch
        %224 = sbr.rel (%p221) target = $region36
      $region35: #{tpu_custom_call.1} parent=5 // pred_region
        %s225 = ssub.s32 %s17, 1
        %s226 = sand.u32 %s44, 1
        %s227 = scalar_lea.sflag [#allocation3], %s226
        %s228 = sand.u32 %s44, 1
        %s229 = smul.addr %s228, 512
        %s230 = scalar_lea.vmem [#allocation2], %s229
        // Predicated region
        $region37: #{tpu_custom_call.1} parent=35 // pred_check
          %p231 = pneg %p57
        $region38: #{tpu_custom_call.1} parent=35 // pred_check_branch
          %233 = sbr.rel (%p231) target = $region40
        $region39: #{tpu_custom_call.1} parent=35 // pred_region
          %235 = dma.done %s227, 8192
        $region40: #{tpu_custom_call.1} parent=35 // pred_fallthru
          _
        // Predicated region
        $region41: #{tpu_custom_call.1} parent=35 // pred_check
          %p236 = pneg %p83
        $region42: #{tpu_custom_call.1} parent=35 // pred_check_branch
          %238 = sbr.rel (%p236) target = $region44
        $region43: #{tpu_custom_call.1} parent=35 // pred_region
          %240 = dma.done [#allocation6], 2048
        $region44: #{tpu_custom_call.1} parent=35 // pred_fallthru
          _
        %s241 = sand.u32 %s44, 1
        %s242 = scalar_lea.sflag [#allocation3], %s241
        %s243 = sand.u32 %s44, 1
        %s244 = smul.addr %s243, 512
        %s245 = scalar_lea.vmem [#allocation2], %s244
        %p246 = pneg %p57
        %p247 = pneg %p54
        %p248 = pneg %p83
        %p249 = pneg %p80
        %p250 = pneg %p104
        %p251 = pneg %p101
        %p252 = pneg %p125
        %p253 = pneg %p122
        %p254 = pneg %p153
        %p255 = pneg %p150
        %s256 = sand.u32 %s140, 1
        %s257 = scalar_lea.sflag [#allocation4], %s256
        %s258 = sand.u32 %s140, 1
        %s259 = smul.addr %s258, 128
        %s260 = scalar_lea.vmem [#allocation7], %s259
        %s261 = smul.u32 16, %s26
        %s262 = smul.u32 16, %s26
        %s263 = smul.u32 16, %s26
        %v264 = vld [vmem:[%s230] sm:$0xff]
        %v265 = vld [vmem:[%s230 + $0x8] sm:$0xff]
        %v266 = vld [vmem:[%s230 + $0x10] sm:$0xff]
        %v267 = vld [vmem:[%s230 + $0x18] sm:$0xff]
        %v268 = vld [vmem:[%s230 + $0x20] sm:$0xff]
        %v269 = vld [vmem:[%s230 + $0x28] sm:$0xff]
        %v270 = vld [vmem:[%s230 + $0x30] sm:$0xff]
        %v271 = vld [vmem:[%s230 + $0x38] sm:$0xff]
        %v272 = vld [vmem:[%s230 + $0x40] sm:$0xff]
        %v273 = vld [vmem:[%s230 + $0x48] sm:$0xff]
        %v274 = vld [vmem:[%s230 + $0x50] sm:$0xff]
        %v275 = vld [vmem:[%s230 + $0x58] sm:$0xff]
        %v276 = vld [vmem:[%s230 + $0x60] sm:$0xff]
        %v277 = vld [vmem:[%s230 + $0x68] sm:$0xff]
        %v278 = vld [vmem:[%s230 + $0x70] sm:$0xff]
        %v279 = vld [vmem:[%s230 + $0x78] sm:$0xff]
        %s280 = scalar_lea.vmem %s230, 128 [#allocation2]
        %v281 = vld [vmem:[%s280] sm:$0xff]
        %v282 = vld [vmem:[%s280 + $0x8] sm:$0xff]
        %v283 = vld [vmem:[%s280 + $0x10] sm:$0xff]
        %v284 = vld [vmem:[%s280 + $0x18] sm:$0xff]
        %v285 = vld [vmem:[%s280 + $0x20] sm:$0xff]
        %v286 = vld [vmem:[%s280 + $0x28] sm:$0xff]
        %v287 = vld [vmem:[%s280 + $0x30] sm:$0xff]
        %v288 = vld [vmem:[%s280 + $0x38] sm:$0xff]
        %v289 = vld [vmem:[%s280 + $0x40] sm:$0xff]
        %v290 = vld [vmem:[%s280 + $0x48] sm:$0xff]
        %v291 = vld [vmem:[%s280 + $0x50] sm:$0xff]
        %v292 = vld [vmem:[%s280 + $0x58] sm:$0xff]
        %v293 = vld [vmem:[%s280 + $0x60] sm:$0xff]
        %v294 = vld [vmem:[%s280 + $0x68] sm:$0xff]
        %v295 = vld [vmem:[%s280 + $0x70] sm:$0xff]
        %v296 = vld [vmem:[%s280 + $0x78] sm:$0xff]
        %v297 = vadd.f32 %v264, %v281
        %v298 = vadd.f32 %v265, %v282
        %v299 = vadd.f32 %v266, %v283
        %v300 = vadd.f32 %v267, %v284
        %v301 = vadd.f32 %v268, %v285
        %v302 = vadd.f32 %v269, %v286
        %v303 = vadd.f32 %v270, %v287
        %v304 = vadd.f32 %v271, %v288
        %v305 = vadd.f32 %v272, %v289
        %v306 = vadd.f32 %v273, %v290
        %v307 = vadd.f32 %v274, %v291
        %v308 = vadd.f32 %v275, %v292
        %v309 = vadd.f32 %v276, %v293
        %v310 = vadd.f32 %v277, %v294
        %v311 = vadd.f32 %v278, %v295
        %v312 = vadd.f32 %v279, %v296
        %s313 = scalar_lea.vmem %s230, 256 [#allocation2]
        %v314 = vld [vmem:[%s313] sm:$0xff]
        %v315 = vld [vmem:[%s313 + $0x8] sm:$0xff]
        %v316 = vld [vmem:[%s313 + $0x10] sm:$0xff]
        %v317 = vld [vmem:[%s313 + $0x18] sm:$0xff]
        %v318 = vld [vmem:[%s313 + $0x20] sm:$0xff]
        %v319 = vld [vmem:[%s313 + $0x28] sm:$0xff]
        %v320 = vld [vmem:[%s313 + $0x30] sm:$0xff]
        %v321 = vld [vmem:[%s313 + $0x38] sm:$0xff]
        %v322 = vld [vmem:[%s313 + $0x40] sm:$0xff]
        %v323 = vld [vmem:[%s313 + $0x48] sm:$0xff]
        %v324 = vld [vmem:[%s313 + $0x50] sm:$0xff]
        %v325 = vld [vmem:[%s313 + $0x58] sm:$0xff]
        %v326 = vld [vmem:[%s313 + $0x60] sm:$0xff]
        %v327 = vld [vmem:[%s313 + $0x68] sm:$0xff]
        %v328 = vld [vmem:[%s313 + $0x70] sm:$0xff]
        %v329 = vld [vmem:[%s313 + $0x78] sm:$0xff]
        %v330 = vadd.f32 %v297, %v314
        %v331 = vadd.f32 %v298, %v315
        %v332 = vadd.f32 %v299, %v316
        %v333 = vadd.f32 %v300, %v317
        %v334 = vadd.f32 %v301, %v318
        %v335 = vadd.f32 %v302, %v319
        %v336 = vadd.f32 %v303, %v320
        %v337 = vadd.f32 %v304, %v321
        %v338 = vadd.f32 %v305, %v322
        %v339 = vadd.f32 %v306, %v323
        %v340 = vadd.f32 %v307, %v324
        %v341 = vadd.f32 %v308, %v325
        %v342 = vadd.f32 %v309, %v326
        %v343 = vadd.f32 %v310, %v327
        %v344 = vadd.f32 %v311, %v328
        %v345 = vadd.f32 %v312, %v329
        %s346 = scalar_lea.vmem %s230, 384 [#allocation2]
        %v347 = vld [vmem:[%s346] sm:$0xff]
        %v348 = vld [vmem:[%s346 + $0x8] sm:$0xff]
        %v349 = vld [vmem:[%s346 + $0x10] sm:$0xff]
        %v350 = vld [vmem:[%s346 + $0x18] sm:$0xff]
        %v351 = vld [vmem:[%s346 + $0x20] sm:$0xff]
        %v352 = vld [vmem:[%s346 + $0x28] sm:$0xff]
        %v353 = vld [vmem:[%s346 + $0x30] sm:$0xff]
        %v354 = vld [vmem:[%s346 + $0x38] sm:$0xff]
        %v355 = vld [vmem:[%s346 + $0x40] sm:$0xff]
        %v356 = vld [vmem:[%s346 + $0x48] sm:$0xff]
        %v357 = vld [vmem:[%s346 + $0x50] sm:$0xff]
        %v358 = vld [vmem:[%s346 + $0x58] sm:$0xff]
        %v359 = vld [vmem:[%s346 + $0x60] sm:$0xff]
        %v360 = vld [vmem:[%s346 + $0x68] sm:$0xff]
        %v361 = vld [vmem:[%s346 + $0x70] sm:$0xff]
        %v362 = vld [vmem:[%s346 + $0x78] sm:$0xff]
        %v363 = vadd.f32 %v330, %v347
        %v364 = vadd.f32 %v331, %v348
        %v365 = vadd.f32 %v332, %v349
        %v366 = vadd.f32 %v333, %v350
        %v367 = vadd.f32 %v334, %v351
        %v368 = vadd.f32 %v335, %v352
        %v369 = vadd.f32 %v336, %v353
        %v370 = vadd.f32 %v337, %v354
        %v371 = vadd.f32 %v338, %v355
        %v372 = vadd.f32 %v339, %v356
        %v373 = vadd.f32 %v340, %v357
        %v374 = vadd.f32 %v341, %v358
        %v375 = vadd.f32 %v342, %v359
        %v376 = vadd.f32 %v343, %v360
        %v377 = vadd.f32 %v344, %v361
        %v378 = vadd.f32 %v345, %v362
        %v379 = vmul.f32 %v363, 0.25
        %v380 = vmul.f32 %v364, 0.25
        %v381 = vmul.f32 %v365, 0.25
        %v382 = vmul.f32 %v366, 0.25
        %v383 = vmul.f32 %v367, 0.25
        %v384 = vmul.f32 %v368, 0.25
        %v385 = vmul.f32 %v369, 0.25
        %v386 = vmul.f32 %v370, 0.25
        %v387 = vmul.f32 %v371, 0.25
        %v388 = vmul.f32 %v372, 0.25
        %v389 = vmul.f32 %v373, 0.25
        %v390 = vmul.f32 %v374, 0.25
        %v391 = vmul.f32 %v375, 0.25
        %v392 = vmul.f32 %v376, 0.25
        %v393 = vmul.f32 %v377, 0.25
        %v394 = vmul.f32 %v378, 0.25
        %v395 = vld [vmem:[#allocation5] sm:$0xff]
        %v396 = vld [vmem:[#allocation5 + $0x8] sm:$0xff]
        %v397 = vld [vmem:[#allocation5 + $0x10] sm:$0xff]
        %v398 = vld [vmem:[#allocation5 + $0x18] sm:$0xff]
        %v399 = vld [vmem:[#allocation5 + $0x20] sm:$0xff]
        %v400 = vld [vmem:[#allocation5 + $0x28] sm:$0xff]
        %v401 = vld [vmem:[#allocation5 + $0x30] sm:$0xff]
        %v402 = vld [vmem:[#allocation5 + $0x38] sm:$0xff]
        %v403 = vld [vmem:[#allocation5 + $0x40] sm:$0xff]
        %v404 = vld [vmem:[#allocation5 + $0x48] sm:$0xff]
        %v405 = vld [vmem:[#allocation5 + $0x50] sm:$0xff]
        %v406 = vld [vmem:[#allocation5 + $0x58] sm:$0xff]
        %v407 = vld [vmem:[#allocation5 + $0x60] sm:$0xff]
        %v408 = vld [vmem:[#allocation5 + $0x68] sm:$0xff]
        %v409 = vld [vmem:[#allocation5 + $0x70] sm:$0xff]
        %v410 = vld [vmem:[#allocation5 + $0x78] sm:$0xff]
        %v411 = vadd.f32 %v379, %v395
        %v412 = vadd.f32 %v380, %v396
        %v413 = vadd.f32 %v381, %v397
        %v414 = vadd.f32 %v382, %v398
        %v415 = vadd.f32 %v383, %v399
        %v416 = vadd.f32 %v384, %v400
        %v417 = vadd.f32 %v385, %v401
        %v418 = vadd.f32 %v386, %v402
        %v419 = vadd.f32 %v387, %v403
        %v420 = vadd.f32 %v388, %v404
        %v421 = vadd.f32 %v389, %v405
        %v422 = vadd.f32 %v390, %v406
        %v423 = vadd.f32 %v391, %v407
        %v424 = vadd.f32 %v392, %v408
        %v425 = vadd.f32 %v393, %v409
        %v426 = vadd.f32 %v394, %v410
        %v427 = vld [vmem:[%s2] sm:$0x1]
        %v428 = vld [vmem:[%s3] sm:$0x1]
        %429 = vadd.xlane.f32.xlu0 %v411
        %v430 = vpop.xlane.xlu0 %429
        %431 = vadd.xlane.f32.xlu0 %v412
        %v432 = vpop.xlane.xlu0 %431
        %433 = vadd.xlane.f32.xlu0 %v413
        %v434 = vpop.xlane.xlu0 %433
        %435 = vadd.xlane.f32.xlu0 %v414
        %v436 = vpop.xlane.xlu0 %435
        %437 = vadd.xlane.f32.xlu0 %v415
        %v438 = vpop.xlane.xlu0 %437
        %439 = vadd.xlane.f32.xlu0 %v416
        %v440 = vpop.xlane.xlu0 %439
        %441 = vadd.xlane.f32.xlu0 %v417
        %v442 = vpop.xlane.xlu0 %441
        %443 = vadd.xlane.f32.xlu0 %v418
        %v444 = vpop.xlane.xlu0 %443
        %445 = vadd.xlane.f32.xlu0 %v419
        %v446 = vpop.xlane.xlu0 %445
        %447 = vadd.xlane.f32.xlu0 %v420
        %v448 = vpop.xlane.xlu0 %447
        %449 = vadd.xlane.f32.xlu0 %v421
        %v450 = vpop.xlane.xlu0 %449
        %451 = vadd.xlane.f32.xlu0 %v422
        %v452 = vpop.xlane.xlu0 %451
        %453 = vadd.xlane.f32.xlu0 %v423
        %v454 = vpop.xlane.xlu0 %453
        %455 = vadd.xlane.f32.xlu0 %v424
        %v456 = vpop.xlane.xlu0 %455
        %457 = vadd.xlane.f32.xlu0 %v425
        %v458 = vpop.xlane.xlu0 %457
        %459 = vadd.xlane.f32.xlu0 %v426
        %v460 = vpop.xlane.xlu0 %459
        %v461 = vrcp.pop 128.0
        %v462 = vmul.f32 128.0, %v461
        %v463 = vsub.f32 1.0, %v462
        %v464 = vmul.f32 %v461, %v463
        %v465 = vadd.f32 %v461, %v464
        %vm466 = vweird.f32 %v461
        %v467 = vsel %vm466, %v461, %v465
        %v468 = vmul.f32 %v430, %v467
        %v469 = vmul.f32 %v432, %v467
        %v470 = vmul.f32 %v434, %v467
        %v471 = vmul.f32 %v436, %v467
        %v472 = vmul.f32 %v438, %v467
        %v473 = vmul.f32 %v440, %v467
        %v474 = vmul.f32 %v442, %v467
        %v475 = vmul.f32 %v444, %v467
        %v476 = vmul.f32 %v446, %v467
        %v477 = vmul.f32 %v448, %v467
        %v478 = vmul.f32 %v450, %v467
        %v479 = vmul.f32 %v452, %v467
        %v480 = vmul.f32 %v454, %v467
        %v481 = vmul.f32 %v456, %v467
        %v482 = vmul.f32 %v458, %v467
        %v483 = vmul.f32 %v460, %v467
        %v484 = vsub.f32 %v411, %v468
        %v485 = vsub.f32 %v412, %v469
        %v486 = vsub.f32 %v413, %v470
        %v487 = vsub.f32 %v414, %v471
        %v488 = vsub.f32 %v415, %v472
        %v489 = vsub.f32 %v416, %v473
        %v490 = vsub.f32 %v417, %v474
        %v491 = vsub.f32 %v418, %v475
        %v492 = vsub.f32 %v419, %v476
        %v493 = vsub.f32 %v420, %v477
        %v494 = vsub.f32 %v421, %v478
        %v495 = vsub.f32 %v422, %v479
        %v496 = vsub.f32 %v423, %v480
        %v497 = vsub.f32 %v424, %v481
        %v498 = vsub.f32 %v425, %v482
        %v499 = vsub.f32 %v426, %v483
        %v500 = vmul.f32 %v484, %v484
        %v501 = vmul.f32 %v485, %v485
        %v502 = vmul.f32 %v486, %v486
        %v503 = vmul.f32 %v487, %v487
        %v504 = vmul.f32 %v488, %v488
        %v505 = vmul.f32 %v489, %v489
        %v506 = vmul.f32 %v490, %v490
        %v507 = vmul.f32 %v491, %v491
        %v508 = vmul.f32 %v492, %v492
        %v509 = vmul.f32 %v493, %v493
        %v510 = vmul.f32 %v494, %v494
        %v511 = vmul.f32 %v495, %v495
        %v512 = vmul.f32 %v496, %v496
        %v513 = vmul.f32 %v497, %v497
        %v514 = vmul.f32 %v498, %v498
        %v515 = vmul.f32 %v499, %v499
        %516 = vadd.xlane.f32.xlu0 %v500
        %v517 = vpop.xlane.xlu0 %516
        %518 = vadd.xlane.f32.xlu0 %v501
        %v519 = vpop.xlane.xlu0 %518
        %520 = vadd.xlane.f32.xlu0 %v502
        %v521 = vpop.xlane.xlu0 %520
        %522 = vadd.xlane.f32.xlu0 %v503
        %v523 = vpop.xlane.xlu0 %522
        %524 = vadd.xlane.f32.xlu0 %v504
        %v525 = vpop.xlane.xlu0 %524
        %526 = vadd.xlane.f32.xlu0 %v505
        %v527 = vpop.xlane.xlu0 %526
        %528 = vadd.xlane.f32.xlu0 %v506
        %v529 = vpop.xlane.xlu0 %528
        %530 = vadd.xlane.f32.xlu0 %v507
        %v531 = vpop.xlane.xlu0 %530
        %532 = vadd.xlane.f32.xlu0 %v508
        %v533 = vpop.xlane.xlu0 %532
        %534 = vadd.xlane.f32.xlu0 %v509
        %v535 = vpop.xlane.xlu0 %534
        %536 = vadd.xlane.f32.xlu0 %v510
        %v537 = vpop.xlane.xlu0 %536
        %538 = vadd.xlane.f32.xlu0 %v511
        %v539 = vpop.xlane.xlu0 %538
        %540 = vadd.xlane.f32.xlu0 %v512
        %v541 = vpop.xlane.xlu0 %540
        %542 = vadd.xlane.f32.xlu0 %v513
        %v543 = vpop.xlane.xlu0 %542
        %544 = vadd.xlane.f32.xlu0 %v514
        %v545 = vpop.xlane.xlu0 %544
        %546 = vadd.xlane.f32.xlu0 %v515
        %v547 = vpop.xlane.xlu0 %546
        %v548 = vmul.f32 %v517, %v467
        %v549 = vmul.f32 %v519, %v467
        %v550 = vmul.f32 %v521, %v467
        %v551 = vmul.f32 %v523, %v467
        %v552 = vmul.f32 %v525, %v467
        %v553 = vmul.f32 %v527, %v467
        %v554 = vmul.f32 %v529, %v467
        %v555 = vmul.f32 %v531, %v467
        %v556 = vmul.f32 %v533, %v467
        %v557 = vmul.f32 %v535, %v467
        %v558 = vmul.f32 %v537, %v467
        %v559 = vmul.f32 %v539, %v467
        %v560 = vmul.f32 %v541, %v467
        %v561 = vmul.f32 %v543, %v467
        %v562 = vmul.f32 %v545, %v467
        %v563 = vmul.f32 %v547, %v467
        %v564 = vadd.f32 %v548, 1e-12
        %v565 = vadd.f32 %v549, 1e-12
        %v566 = vadd.f32 %v550, 1e-12
        %v567 = vadd.f32 %v551, 1e-12
        %v568 = vadd.f32 %v552, 1e-12
        %v569 = vadd.f32 %v553, 1e-12
        %v570 = vadd.f32 %v554, 1e-12
        %v571 = vadd.f32 %v555, 1e-12
        %v572 = vadd.f32 %v556, 1e-12
        %v573 = vadd.f32 %v557, 1e-12
        %v574 = vadd.f32 %v558, 1e-12
        %v575 = vadd.f32 %v559, 1e-12
        %v576 = vadd.f32 %v560, 1e-12
        %v577 = vadd.f32 %v561, 1e-12
        %v578 = vadd.f32 %v562, 1e-12
        %v579 = vadd.f32 %v563, 1e-12
        %v580 = vrsqrt.pop %v564
        %v581 = vmul.f32 %v580, %v564
        %v582 = vmul.f32 %v581, %v580
        %v583 = vmul.f32 0.5, %v582
        %v584 = vsub.f32 1.5, %v583
        %v585 = vmul.f32 %v580, %v584
        %vm586 = vweird.f32 %v564
        %vm587 = vweird.f32 %v580
        %vm588 = vmor %vm586, %vm587
        %v589 = vsel %vm588, %v580, %v585
        %v590 = vrsqrt.pop %v565
        %v591 = vmul.f32 %v590, %v565
        %v592 = vmul.f32 %v591, %v590
        %v593 = vmul.f32 0.5, %v592
        %v594 = vsub.f32 1.5, %v593
        %v595 = vmul.f32 %v590, %v594
        %vm596 = vweird.f32 %v565
        %vm597 = vweird.f32 %v590
        %vm598 = vmor %vm596, %vm597
        %v599 = vsel %vm598, %v590, %v595
        %v600 = vrsqrt.pop %v566
        %v601 = vmul.f32 %v600, %v566
        %v602 = vmul.f32 %v601, %v600
        %v603 = vmul.f32 0.5, %v602
        %v604 = vsub.f32 1.5, %v603
        %v605 = vmul.f32 %v600, %v604
        %vm606 = vweird.f32 %v566
        %vm607 = vweird.f32 %v600
        %vm608 = vmor %vm606, %vm607
        %v609 = vsel %vm608, %v600, %v605
        %v610 = vrsqrt.pop %v567
        %v611 = vmul.f32 %v610, %v567
        %v612 = vmul.f32 %v611, %v610
        %v613 = vmul.f32 0.5, %v612
        %v614 = vsub.f32 1.5, %v613
        %v615 = vmul.f32 %v610, %v614
        %vm616 = vweird.f32 %v567
        %vm617 = vweird.f32 %v610
        %vm618 = vmor %vm616, %vm617
        %v619 = vsel %vm618, %v610, %v615
        %v620 = vrsqrt.pop %v568
        %v621 = vmul.f32 %v620, %v568
        %v622 = vmul.f32 %v621, %v620
        %v623 = vmul.f32 0.5, %v622
        %v624 = vsub.f32 1.5, %v623
        %v625 = vmul.f32 %v620, %v624
        %vm626 = vweird.f32 %v568
        %vm627 = vweird.f32 %v620
        %vm628 = vmor %vm626, %vm627
        %v629 = vsel %vm628, %v620, %v625
        %v630 = vrsqrt.pop %v569
        %v631 = vmul.f32 %v630, %v569
        %v632 = vmul.f32 %v631, %v630
        %v633 = vmul.f32 0.5, %v632
        %v634 = vsub.f32 1.5, %v633
        %v635 = vmul.f32 %v630, %v634
        %vm636 = vweird.f32 %v569
        %vm637 = vweird.f32 %v630
        %vm638 = vmor %vm636, %vm637
        %v639 = vsel %vm638, %v630, %v635
        %v640 = vrsqrt.pop %v570
        %v641 = vmul.f32 %v640, %v570
        %v642 = vmul.f32 %v641, %v640
        %v643 = vmul.f32 0.5, %v642
        %v644 = vsub.f32 1.5, %v643
        %v645 = vmul.f32 %v640, %v644
        %vm646 = vweird.f32 %v570
        %vm647 = vweird.f32 %v640
        %vm648 = vmor %vm646, %vm647
        %v649 = vsel %vm648, %v640, %v645
        %v650 = vrsqrt.pop %v571
        %v651 = vmul.f32 %v650, %v571
        %v652 = vmul.f32 %v651, %v650
        %v653 = vmul.f32 0.5, %v652
        %v654 = vsub.f32 1.5, %v653
        %v655 = vmul.f32 %v650, %v654
        %vm656 = vweird.f32 %v571
        %vm657 = vweird.f32 %v650
        %vm658 = vmor %vm656, %vm657
        %v659 = vsel %vm658, %v650, %v655
        %v660 = vrsqrt.pop %v572
        %v661 = vmul.f32 %v660, %v572
        %v662 = vmul.f32 %v661, %v660
        %v663 = vmul.f32 0.5, %v662
        %v664 = vsub.f32 1.5, %v663
        %v665 = vmul.f32 %v660, %v664
        %vm666 = vweird.f32 %v572
        %vm667 = vweird.f32 %v660
        %vm668 = vmor %vm666, %vm667
        %v669 = vsel %vm668, %v660, %v665
        %v670 = vrsqrt.pop %v573
        %v671 = vmul.f32 %v670, %v573
        %v672 = vmul.f32 %v671, %v670
        %v673 = vmul.f32 0.5, %v672
        %v674 = vsub.f32 1.5, %v673
        %v675 = vmul.f32 %v670, %v674
        %vm676 = vweird.f32 %v573
        %vm677 = vweird.f32 %v670
        %vm678 = vmor %vm676, %vm677
        %v679 = vsel %vm678, %v670, %v675
        %v680 = vrsqrt.pop %v574
        %v681 = vmul.f32 %v680, %v574
        %v682 = vmul.f32 %v681, %v680
        %v683 = vmul.f32 0.5, %v682
        %v684 = vsub.f32 1.5, %v683
        %v685 = vmul.f32 %v680, %v684
        %vm686 = vweird.f32 %v574
        %vm687 = vweird.f32 %v680
        %vm688 = vmor %vm686, %vm687
        %v689 = vsel %vm688, %v680, %v685
        %v690 = vrsqrt.pop %v575
        %v691 = vmul.f32 %v690, %v575
        %v692 = vmul.f32 %v691, %v690
        %v693 = vmul.f32 0.5, %v692
        %v694 = vsub.f32 1.5, %v693
        %v695 = vmul.f32 %v690, %v694
        %vm696 = vweird.f32 %v575
        %vm697 = vweird.f32 %v690
        %vm698 = vmor %vm696, %vm697
        %v699 = vsel %vm698, %v690, %v695
        %v700 = vrsqrt.pop %v576
        %v701 = vmul.f32 %v700, %v576
        %v702 = vmul.f32 %v701, %v700
        %v703 = vmul.f32 0.5, %v702
        %v704 = vsub.f32 1.5, %v703
        %v705 = vmul.f32 %v700, %v704
        %vm706 = vweird.f32 %v576
        %vm707 = vweird.f32 %v700
        %vm708 = vmor %vm706, %vm707
        %v709 = vsel %vm708, %v700, %v705
        %v710 = vrsqrt.pop %v577
        %v711 = vmul.f32 %v710, %v577
        %v712 = vmul.f32 %v711, %v710
        %v713 = vmul.f32 0.5, %v712
        %v714 = vsub.f32 1.5, %v713
        %v715 = vmul.f32 %v710, %v714
        %vm716 = vweird.f32 %v577
        %vm717 = vweird.f32 %v710
        %vm718 = vmor %vm716, %vm717
        %v719 = vsel %vm718, %v710, %v715
        %v720 = vrsqrt.pop %v578
        %v721 = vmul.f32 %v720, %v578
        %v722 = vmul.f32 %v721, %v720
        %v723 = vmul.f32 0.5, %v722
        %v724 = vsub.f32 1.5, %v723
        %v725 = vmul.f32 %v720, %v724
        %vm726 = vweird.f32 %v578
        %vm727 = vweird.f32 %v720
        %vm728 = vmor %vm726, %vm727
        %v729 = vsel %vm728, %v720, %v725
        %v730 = vrsqrt.pop %v579
        %v731 = vmul.f32 %v730, %v579
        %v732 = vmul.f32 %v731, %v730
        %v733 = vmul.f32 0.5, %v732
        %v734 = vsub.f32 1.5, %v733
        %v735 = vmul.f32 %v730, %v734
        %vm736 = vweird.f32 %v579
        %vm737 = vweird.f32 %v730
        %vm738 = vmor %vm736, %vm737
        %v739 = vsel %vm738, %v730, %v735
        %v740 = vmul.f32 %v484, %v589
        %v741 = vmul.f32 %v485, %v599
        %v742 = vmul.f32 %v486, %v609
        %v743 = vmul.f32 %v487, %v619
        %v744 = vmul.f32 %v488, %v629
        %v745 = vmul.f32 %v489, %v639
        %v746 = vmul.f32 %v490, %v649
        %v747 = vmul.f32 %v491, %v659
        %v748 = vmul.f32 %v492, %v669
        %v749 = vmul.f32 %v493, %v679
        %v750 = vmul.f32 %v494, %v689
        %v751 = vmul.f32 %v495, %v699
        %v752 = vmul.f32 %v496, %v709
        %v753 = vmul.f32 %v497, %v719
        %v754 = vmul.f32 %v498, %v729
        %v755 = vmul.f32 %v499, %v739
        %v757 = vperm.slane %v427, 0
        %v759 = vmul.f32 %v740, %v757
        %v760 = vmul.f32 %v741, %v757
        %v761 = vmul.f32 %v742, %v757
        %v762 = vmul.f32 %v743, %v757
        %v763 = vmul.f32 %v744, %v757
        %v764 = vmul.f32 %v745, %v757
        %v765 = vmul.f32 %v746, %v757
        %v766 = vmul.f32 %v747, %v757
        %v767 = vmul.f32 %v748, %v757
        %v768 = vmul.f32 %v749, %v757
        %v769 = vmul.f32 %v750, %v757
        %v770 = vmul.f32 %v751, %v757
        %v771 = vmul.f32 %v752, %v757
        %v772 = vmul.f32 %v753, %v757
        %v773 = vmul.f32 %v754, %v757
        %v774 = vmul.f32 %v755, %v757
        %v776 = vperm.slane %v428, 0
        %v778 = vadd.f32 %v759, %v776
        %v779 = vadd.f32 %v760, %v776
        %v780 = vadd.f32 %v761, %v776
        %v781 = vadd.f32 %v762, %v776
        %v782 = vadd.f32 %v763, %v776
        %v783 = vadd.f32 %v764, %v776
        %v784 = vadd.f32 %v765, %v776
        %v785 = vadd.f32 %v766, %v776
        %v786 = vadd.f32 %v767, %v776
        %v787 = vadd.f32 %v768, %v776
        %v788 = vadd.f32 %v769, %v776
        %v789 = vadd.f32 %v770, %v776
        %v790 = vadd.f32 %v771, %v776
        %v791 = vadd.f32 %v772, %v776
        %v792 = vadd.f32 %v773, %v776
        %v793 = vadd.f32 %v774, %v776
        %794 = vst [vmem:[%s260] sm:$0xff] %v778
        %795 = vst [vmem:[%s260 + $0x8] sm:$0xff] %v779
        %796 = vst [vmem:[%s260 + $0x10] sm:$0xff] %v780
        %797 = vst [vmem:[%s260 + $0x18] sm:$0xff] %v781
        %798 = vst [vmem:[%s260 + $0x20] sm:$0xff] %v782
        %799 = vst [vmem:[%s260 + $0x28] sm:$0xff] %v783
        %800 = vst [vmem:[%s260 + $0x30] sm:$0xff] %v784
        %801 = vst [vmem:[%s260 + $0x38] sm:$0xff] %v785
        %802 = vst [vmem:[%s260 + $0x40] sm:$0xff] %v786
        %803 = vst [vmem:[%s260 + $0x48] sm:$0xff] %v787
        %804 = vst [vmem:[%s260 + $0x50] sm:$0xff] %v788
        %805 = vst [vmem:[%s260 + $0x58] sm:$0xff] %v789
        %806 = vst [vmem:[%s260 + $0x60] sm:$0xff] %v790
        %807 = vst [vmem:[%s260 + $0x68] sm:$0xff] %v791
        %808 = vst [vmem:[%s260 + $0x70] sm:$0xff] %v792
        %809 = vst [vmem:[%s260 + $0x78] sm:$0xff] %v793
        %s810 = sand.u32 %s140, 1
        %s811 = scalar_lea.sflag [#allocation4], %s810
        %s812 = sand.u32 %s140, 1
        %s813 = smul.addr %s812, 128
        %s814 = scalar_lea.vmem [#allocation7], %s813
        // Predicated region
        $region45: #{tpu_custom_call.1} parent=35 // pred_check
          %p815 = pneg %p150
        $region46: #{tpu_custom_call.1} parent=35 // pred_check_branch
          %817 = sbr.rel (%p815) target = $region48
        $region47: #{tpu_custom_call.1} parent=35 // pred_region
          %s818 = smul.u32 16, %s26
          %820 = vsyncadd %s811, 0
          %s821 = smul.addr %s27, 16
          %s822 = sadd.s32 %s818, %s821
          %s823 = smul.addr %s822, 8
          %s824 = scalar_lea.hbm %s4, %s823
          %s825 = sshll.u32 %s814, 4
          %s826 = int_to_ptr.vmem [resolvable:$true] %s825
          %s827 = sshll.u32 %s824, 4
          %s828 = int_to_ptr.hbm [resolvable:$true] %s827
          %833 = dma.vmem_to_hbm [thread:$0]  %s826, 2048, %s828, %s811, 128, 128, 8
        $region48: #{tpu_custom_call.1} parent=35 // pred_fallthru
          _
      $region36: #{tpu_custom_call.1} parent=5 // pred_fallthru
        _
      %p834 = scmp.le.s32.totalorder 2, %s17
      // Predicated region
      $region49: #{tpu_custom_call.1} parent=5 // pred_check
        %p835 = pneg %p834
      $region50: #{tpu_custom_call.1} parent=5 // pred_check_branch
        %837 = sbr.rel (%p835) target = $region52
      $region51: #{tpu_custom_call.1} parent=5 // pred_region
        %s838 = ssub.s32 %s17, 2
        // Predicated region
        $region53: #{tpu_custom_call.1} parent=51 // pred_check
          %p839 = pneg %p156
        $region54: #{tpu_custom_call.1} parent=51 // pred_check_branch
          %841 = sbr.rel (%p839) target = $region56
        $region55: #{tpu_custom_call.1} parent=51 // pred_region
          %s842 = sand.u32 %s141, 1
          %s843 = scalar_lea.sflag [#allocation4], %s842
          %s844 = sand.u32 %s141, 1
          %s845 = smul.addr %s844, 128
          %s846 = scalar_lea.vmem [#allocation7], %s845
          %848 = dma.done %s843, 2048
        $region56: #{tpu_custom_call.1} parent=51 // pred_fallthru
          _
      $region52: #{tpu_custom_call.1} parent=5 // pred_fallthru
        _
    $region6: #{tpu_custom_call.1} parent=1 // loop_footer
      %s21 = sadd.s32 1, %s17
    $region7: #{tpu_custom_call.1} parent=1 // loop_footer_branch
      %16 = sbr.rel target = $region3
    $region8: #{tpu_custom_call.1} parent=1 // loop_exit
      _
    %849 = vsyncpa [#allocation3], 1
    %s850 = scalar_lea.sflag [#allocation3], 1
    %851 = vsyncpa %s850, 1
    %852 = vsyncpa [#allocation6], 1
    %853 = vsyncpa [#allocation4], 1
    %s854 = scalar_lea.sflag [#allocation4], 1
    %855 = vsyncpa %s854, 1

</llo_original>
